<compile_context>
chip_gen: v6e
topology: v6e:2x2x1
jax: 0.10.0
libtpu: 0.0.40
codegen_flags: <defaults>
</compile_context>

<pallas_src>
from functools import partial

import jax
import jax.numpy as jnp
from jax.experimental import pallas as pl
from jax.experimental.pallas import tpu as pltpu


_HW_BLOCK_BUDGET_BYTES = 8 * 1024 * 1024     # per spatial block (double-buffered)
_VMEM_LIMIT_BYTES = 48 * 1024 * 1024         # safe on v5e/v6e (128 MiB) and v7x (64 MiB)


def _fc_sigmoid_epilogue(avg, mx, w1t_ref, w2t_ref, o_ref, n_tile):
    """avg, mx: (n_tile, C) f32.  fc1 -> relu -> (+) -> fc2 -> sigmoid."""
    w1t = w1t_ref[...].astype(jnp.float32)                    # (C, Ch)
    w2t = w2t_ref[...].astype(jnp.float32)                    # (Ch, C)
    # Stack both branches into a single fc1 matmul (review item 7).
    both = jnp.concatenate([avg, mx], axis=0)                 # (2*n_tile, C)
    h = jnp.maximum(
        jnp.dot(both, w1t, preferred_element_type=jnp.float32), 0.0)
    h = h[:n_tile] + h[n_tile:]                               # (n_tile, Ch)
    # fc2 applied once (linearity): fc2(a) + fc2(b) == fc2(a + b).
    out = jnp.dot(h, w2t, preferred_element_type=jnp.float32)  # (n_tile, C)
    o_ref[...] = jax.nn.sigmoid(out).astype(o_ref.dtype)


def _channel_attention_lane_kernel(x_ref, w1t_ref, w2t_ref, o_ref,
                                   sum_ref, max_ref, *,
                                   hw_total, hw_tile, num_hw_tiles,
                                   needs_mask, n_tile):
    # x_ref   : (n_tile, C, hw_tile)  current spatial tile
    # w1t_ref : (C, Ch)   w2t_ref : (Ch, C)
    # o_ref   : (n_tile, C)
    # sum_ref : (n_tile, C, 128) f32 per-lane sum accumulator
    # max_ref : (n_tile, C, 128) per-lane max accumulator (f32 or bf16)
    k = pl.program_id(1)
    n_k = pl.num_programs(1)
    n_chunks = hw_tile // 128

    @pl.when(k == 0)
    def _init():
        sum_ref[...] = jnp.zeros(sum_ref.shape, sum_ref.dtype)
        max_ref[...] = jnp.full(max_ref.shape, -jnp.inf, dtype=max_ref.dtype)

    def accumulate(masked, tile_start):
        # Statically-unrolled, lane-aligned VPU accumulation (no per-step XLU).
        for j in range(n_chunks):
            if masked:
                abs_start = tile_start + j * 128          # static
                if abs_start >= hw_total:
                    continue                              # fully out of range
                partial_chunk = (abs_start + 128) > hw_total
            else:
                partial_chunk = False
            chunk = x_ref[:, :, j * 128:(j + 1) * 128]    # (n_tile, C, 128)
            cs = chunk.astype(jnp.float32)
            cm = chunk.astype(max_ref.dtype)
            if partial_chunk:
                lane = jax.lax.broadcasted_iota(jnp.int32, (1, 1, 128), 2)
                valid = (abs_start + lane) < hw_total
                cs = jnp.where(valid, cs, 0.0)
                cm = jnp.where(valid, cm, -jnp.inf)
            sum_ref[...] = sum_ref[...] + cs
            max_ref[...] = jnp.maximum(max_ref[...], cm)

    if needs_mask:
        # Only the last spatial tile is ragged: keep full tiles mask-free.
        @pl.when(k != n_k - 1)
        def _full_tiles():
            accumulate(False, 0)

        @pl.when(k == n_k - 1)
        def _tail_tile():
            accumulate(True, (num_hw_tiles - 1) * hw_tile)
    else:
        accumulate(False, 0)

    @pl.when(k == n_k - 1)
    def _finalize():
        # The single cross-lane (XLU) reduction of the whole kernel.
        avg = jnp.sum(sum_ref[...], axis=-1) * jnp.float32(1.0 / hw_total)
        mx = jnp.max(max_ref[...], axis=-1).astype(jnp.float32)
        _fc_sigmoid_epilogue(avg, mx, w1t_ref, w2t_ref, o_ref, n_tile)


def _channel_attention_simple_kernel(x_ref, w1t_ref, w2t_ref, o_ref, *,
                                     hw_total, n_tile):
    # Whole spatial extent in one block (single grid step): one-shot reduce.
    x32 = x_ref[...].astype(jnp.float32)                  # (n_tile, C, HW)
    avg = jnp.sum(x32, axis=-1) * jnp.float32(1.0 / hw_total)
    mx = jnp.max(x32, axis=-1)
    _fc_sigmoid_epilogue(avg, mx, w1t_ref, w2t_ref, o_ref, n_tile)


def _pick_hw_tile(hw, n_tile, c, itemsize, budget_bytes=_HW_BLOCK_BUDGET_BYTES):
    """Largest lane-aligned (multiple-of-128) HW tile under the VMEM budget."""
    per_hw_bytes = max(1, n_tile * c * itemsize)
    max_hw = budget_bytes // per_hw_bytes
    if hw <= max_hw:
        return hw                                  # whole spatial extent, one block
    return max(128, (max_hw // 128) * 128)


def channel_attention(x, w1, w2, *, hw_tile=None):
    """x: (N, C, H, W); w1: (C//16, C); w2: (C, C//16)  ->  (N, C, 1, 1)."""
    N, C, H, W = x.shape
    Ch = w1.shape[0]
    HW = H * W
    x_flat = x.reshape(N, C, HW)

    # Pre-transpose the (tiny) weights in the wrapper: no in-kernel transposes.
    w1t = jnp.transpose(w1)                        # (C, Ch)
    w2t = jnp.transpose(w2)                        # (Ch, C)

    itemsize = jnp.dtype(x.dtype).itemsize
    # bf16 max path stays packed on v6e/v7x; sum path is always widened to f32.
    if jnp.dtype(x.dtype) in (jnp.dtype(jnp.float32), jnp.dtype(jnp.bfloat16)):
        acc_max_dtype = x.dtype
    else:
        acc_max_dtype = jnp.float32

    # Batch tiling: rows of 8 when divisible (>= 2 "parallel" steps for v7x
    # megacore once N >= 16); otherwise the full batch (sublane-legal out block).
    n_tile = 8 if (N > 8 and N % 8 == 0) else N

    if hw_tile is None:
        hw_tile = _pick_hw_tile(HW, n_tile, C, itemsize)
    if hw_tile >= HW:
        hw_tile = HW                               # single full spatial block
    else:
        hw_tile = max(128, (hw_tile // 128) * 128)  # lane-aligned tiles
        if hw_tile >= HW:
            hw_tile = HW

    # Advisory cost: HBM-streaming reduction + tiny matmuls + sigmoid.
    cost = pl.CostEstimate(
        flops=3 * N * C * HW + 2 * (2 * N * C * Ch + N * Ch * C),
        transcendentals=N * C,
        bytes_accessed=(x_flat.size * itemsize
                        + (w1.size + w2.size) * 4 + N * C * itemsize),
    )

    if hw_tile == HW:
        # Single spatial block per batch tile: simple one-shot kernel.
        kernel = partial(_channel_attention_simple_kernel,
                         hw_total=HW, n_tile=n_tile)
        out = pl.pallas_call(
            kernel,
            out_shape=jax.ShapeDtypeStruct((N, C), x.dtype),
            grid=(N // n_tile,),
            in_specs=[
                pl.BlockSpec((n_tile, C, HW), lambda i: (i, 0, 0)),
                pl.BlockSpec((C, Ch), lambda i: (0, 0)),
                pl.BlockSpec((Ch, C), lambda i: (0, 0)),
            ],
            out_specs=pl.BlockSpec((n_tile, C), lambda i: (i, 0)),
            compiler_params=pltpu.CompilerParams(
                dimension_semantics=("parallel",),
                vmem_limit_bytes=_VMEM_LIMIT_BYTES,
            ),
            cost_estimate=cost,
        )(x_flat, w1t, w2t)
    else:
        num_hw_tiles = pl.cdiv(HW, hw_tile)
        needs_mask = (HW % hw_tile) != 0
        kernel = partial(_channel_attention_lane_kernel,
                         hw_total=HW, hw_tile=hw_tile,
                         num_hw_tiles=num_hw_tiles,
                         needs_mask=needs_mask, n_tile=n_tile)
        out = pl.pallas_call(
            kernel,
            out_shape=jax.ShapeDtypeStruct((N, C), x.dtype),
            grid=(N // n_tile, num_hw_tiles),
            in_specs=[
                pl.BlockSpec((n_tile, C, hw_tile), lambda i, k: (i, 0, k)),
                pl.BlockSpec((C, Ch), lambda i, k: (0, 0)),
                pl.BlockSpec((Ch, C), lambda i, k: (0, 0)),
            ],
            out_specs=pl.BlockSpec((n_tile, C), lambda i, k: (i, 0)),
            scratch_shapes=[
                pltpu.VMEM((n_tile, C, 128), jnp.float32),      # per-lane sum
                pltpu.VMEM((n_tile, C, 128), acc_max_dtype),    # per-lane max
            ],
            compiler_params=pltpu.CompilerParams(
                dimension_semantics=("parallel", "arbitrary"),
                vmem_limit_bytes=_VMEM_LIMIT_BYTES,
            ),
            cost_estimate=cost,
        )(x_flat, w1t, w2t)

    return out.reshape(N, C, 1, 1)


def channel_attention_ref(x, w1, w2):
    """Pure-JAX reference matching the PyTorch module."""
    avg = jnp.mean(x, axis=(2, 3))                 # (N, C)
    mx = jnp.max(x, axis=(2, 3))                   # (N, C)
    h_avg = jax.nn.relu(avg @ w1.T)
    h_max = jax.nn.relu(mx @ w1.T)
    out = h_avg @ w2.T + h_max @ w2.T
    return jax.nn.sigmoid(out)[:, :, None, None]


if __name__ == "__main__":
    # Small shapes consistent with the module (C >= 16 so C // 16 >= 1).
    N, C, H, W = 2, 64, 16, 16
    Ch = C // 16

    key = jax.random.PRNGKey(0)
    kx, k1, k2 = jax.random.split(key, 3)
    x = jax.random.normal(kx, (N, C, H, W), dtype=jnp.float32)
    w1 = jax.random.normal(k1, (Ch, C), dtype=jnp.float32) * 0.1   # fc1: C -> C//16
    w2 = jax.random.normal(k2, (C, Ch), dtype=jnp.float32) * 0.1   # fc2: C//16 -> C

    # (a) hw_tile=128 forces a 2-step pipelined reduction (per-lane accumulators).
    out = jax.block_until_ready(channel_attention(x, w1, w2, hw_tile=128))
    ref = channel_attention_ref(x, w1, w2)
    assert out.shape == (N, C, 1, 1)
    assert jnp.allclose(out, ref, atol=1e-5, rtol=1e-5)

    # (b) ragged spatial extent (HW=200, tile=128): masked tail gated to last tile.
    x2 = jax.random.normal(jax.random.PRNGKey(1), (N, C, 10, 20), dtype=jnp.float32)
    out2 = jax.block_until_ready(channel_attention(x2, w1, w2, hw_tile=128))
    ref2 = channel_attention_ref(x2, w1, w2)
    assert jnp.allclose(out2, ref2, atol=1e-5, rtol=1e-5)

    # (c) small spatial extent (7x7 < 128 lanes): single-block simple path.
    x3 = jax.random.normal(jax.random.PRNGKey(2), (N, C, 7, 7), dtype=jnp.float32)
    out3 = jax.block_until_ready(channel_attention(x3, w1, w2))
    ref3 = channel_attention_ref(x3, w1, w2)
    assert jnp.allclose(out3, ref3, atol=1e-5, rtol=1e-5)

    print("KERNEL_OK")
</pallas_src>

<mosaic_0001>
module attributes {stable_mosaic.version = 11 : i64} {
  func.func @_channel_attention_lane_kernel(%arg0: i32, %arg1: i32, %arg2: memref<2x64x128xf32, #tpu.memory_space<vmem>>, %arg3: memref<64x4xf32, #tpu.memory_space<vmem>>, %arg4: memref<4x64xf32, #tpu.memory_space<vmem>>, %arg5: memref<2x64xf32, #tpu.memory_space<vmem>>, %arg6: memref<2x64x128xf32, #tpu.memory_space<vmem>>, %arg7: memref<2x64x128xf32, #tpu.memory_space<vmem>>) attributes {dimension_semantics = [#tpu.dimension_semantics<parallel>, #tpu.dimension_semantics<arbitrary>], iteration_bounds = array<i64: 1, 2>, scalar_prefetch = 0 : i64, scratch_operands = 2 : i64, tpu.core_type = #tpu.core_type<tc>, window_params = [{transform_indices = @transform_0, window_bounds = array<i64: 2, 64, 128>}, {pipeline_mode = #tpu.pipeline_mode<synchronous>, transform_indices = @transform_1, window_bounds = array<i64: 64, 4>}, {pipeline_mode = #tpu.pipeline_mode<synchronous>, transform_indices = @transform_2, window_bounds = array<i64: 4, 64>}, {transform_indices = @transform_3, window_bounds = array<i64: 2, 64>}]} {
    %c0_i32 = arith.constant 0 : i32
    %0 = arith.cmpi eq, %arg1, %c0_i32 : i32
    %1 = arith.extui %0 : i1 to i32
    %c0_i32_0 = arith.constant 0 : i32
    %2 = arith.cmpi ne, %1, %c0_i32_0 : i32
    scf.if %2 {
      %cst = arith.constant 0.000000e+00 : f32
      %13 = vector.broadcast %cst : f32 to vector<2x64x128xf32>
      %c0_16 = arith.constant 0 : index
      %c0_17 = arith.constant 0 : index
      %c0_18 = arith.constant 0 : index
      %14 = vector.load %arg6[%c0_16, %c0_17, %c0_18] : memref<2x64x128xf32, #tpu.memory_space<vmem>>, vector<2x64x128xf32>
      tpu.vector_store %arg6[%c0_16, %c0_17, %c0_18], %13 {strides = array<i32>} : memref<2x64x128xf32, #tpu.memory_space<vmem>>, vector<2x64x128xf32>,
      %cst_19 = arith.constant 0xFF800000 : f32
      %15 = vector.broadcast %cst_19 : f32 to vector<2x64x128xf32>
      %c0_20 = arith.constant 0 : index
      %c0_21 = arith.constant 0 : index
      %c0_22 = arith.constant 0 : index
      %16 = vector.load %arg7[%c0_20, %c0_21, %c0_22] : memref<2x64x128xf32, #tpu.memory_space<vmem>>, vector<2x64x128xf32>
      tpu.vector_store %arg7[%c0_20, %c0_21, %c0_22], %15 {strides = array<i32>} : memref<2x64x128xf32, #tpu.memory_space<vmem>>, vector<2x64x128xf32>,
    } else {
    }
    %c0 = arith.constant 0 : index
    %c0_1 = arith.constant 0 : index
    %c0_2 = arith.constant 0 : index
    %3 = vector.load %arg2[%c0, %c0_1, %c0_2] : memref<2x64x128xf32, #tpu.memory_space<vmem>>, vector<2x64x128xf32>
    %c0_3 = arith.constant 0 : index
    %c0_4 = arith.constant 0 : index
    %c0_5 = arith.constant 0 : index
    %4 = vector.load %arg6[%c0_3, %c0_4, %c0_5] : memref<2x64x128xf32, #tpu.memory_space<vmem>>, vector<2x64x128xf32>
    %5 = arith.addf %4, %3 : vector<2x64x128xf32>
    %c0_6 = arith.constant 0 : index
    %c0_7 = arith.constant 0 : index
    %c0_8 = arith.constant 0 : index
    %6 = vector.load %arg6[%c0_6, %c0_7, %c0_8] : memref<2x64x128xf32, #tpu.memory_space<vmem>>, vector<2x64x128xf32>
    tpu.vector_store %arg6[%c0_6, %c0_7, %c0_8], %5 {strides = array<i32>} : memref<2x64x128xf32, #tpu.memory_space<vmem>>, vector<2x64x128xf32>,
    %c0_9 = arith.constant 0 : index
    %c0_10 = arith.constant 0 : index
    %c0_11 = arith.constant 0 : index
    %7 = vector.load %arg7[%c0_9, %c0_10, %c0_11] : memref<2x64x128xf32, #tpu.memory_space<vmem>>, vector<2x64x128xf32>
    %8 = arith.maximumf %7, %3 : vector<2x64x128xf32>
    %c0_12 = arith.constant 0 : index
    %c0_13 = arith.constant 0 : index
    %c0_14 = arith.constant 0 : index
    %9 = vector.load %arg7[%c0_12, %c0_13, %c0_14] : memref<2x64x128xf32, #tpu.memory_space<vmem>>, vector<2x64x128xf32>
    tpu.vector_store %arg7[%c0_12, %c0_13, %c0_14], %8 {strides = array<i32>} : memref<2x64x128xf32, #tpu.memory_space<vmem>>, vector<2x64x128xf32>,
    %c1_i32 = arith.constant 1 : i32
    %10 = arith.cmpi eq, %arg1, %c1_i32 : i32
    %11 = arith.extui %10 : i1 to i32
    %c0_i32_15 = arith.constant 0 : i32
    %12 = arith.cmpi ne, %11, %c0_i32_15 : i32
    scf.if %12 {
      %c0_16 = arith.constant 0 : index
      %c0_17 = arith.constant 0 : index
      %c0_18 = arith.constant 0 : index
      %13 = vector.load %arg6[%c0_16, %c0_17, %c0_18] : memref<2x64x128xf32, #tpu.memory_space<vmem>>, vector<2x64x128xf32>
      %cst = arith.constant dense<0.000000e+00> : vector<2x64xf32>
      %14 = vector.multi_reduction <add>, %13, %cst [2] : vector<2x64x128xf32> to vector<2x64xf32>
      %cst_19 = arith.constant 3.906250e-03 : f32
      %15 = vector.broadcast %cst_19 : f32 to vector<2x64xf32>
      %16 = arith.mulf %14, %15 : vector<2x64xf32>
      %c0_20 = arith.constant 0 : index
      %c0_21 = arith.constant 0 : index
      %c0_22 = arith.constant 0 : index
      %17 = vector.load %arg7[%c0_20, %c0_21, %c0_22] : memref<2x64x128xf32, #tpu.memory_space<vmem>>, vector<2x64x128xf32>
      %cst_23 = arith.constant dense<0xFF800000> : vector<2x64xf32>
      %18 = vector.multi_reduction <maximumf>, %17, %cst_23 [2] : vector<2x64x128xf32> to vector<2x64xf32>
      %c0_24 = arith.constant 0 : index
      %c0_25 = arith.constant 0 : index
      %19 = vector.load %arg3[%c0_24, %c0_25] : memref<64x4xf32, #tpu.memory_space<vmem>>, vector<64x4xf32>
      %c0_26 = arith.constant 0 : index
      %c0_27 = arith.constant 0 : index
      %20 = vector.load %arg4[%c0_26, %c0_27] : memref<4x64xf32, #tpu.memory_space<vmem>>, vector<4x64xf32>
      %21 = tpu.concatenate %16, %18 in 0 : vector<2x64xf32>, vector<2x64xf32> -> vector<4x64xf32>
      %cst_28 = arith.constant dense<0.000000e+00> : vector<4x4xf32>
      %22 = tpu.matmul %21, %19, %cst_28 {dimension_numbers = #tpu.dot_dimension_numbers<[1], [0], [0], [1], [0, 0, 1, 1], [], []>} : vector<4x64xf32>, vector<64x4xf32>, vector<4x4xf32> -> vector<4x4xf32>
      %cst_29 = arith.constant 0.000000e+00 : f32
      %23 = vector.broadcast %cst_29 : f32 to vector<4x4xf32>
      %24 = arith.maximumf %22, %23 : vector<4x4xf32>
      %25 = vector.extract_strided_slice %24 {offsets = [0, 0], sizes = [2, 4], strides = [1, 1]} : vector<4x4xf32> to vector<2x4xf32>
      %26 = vector.extract_strided_slice %24 {offsets = [2, 0], sizes = [2, 4], strides = [1, 1]} : vector<4x4xf32> to vector<2x4xf32>
      %27 = arith.addf %25, %26 : vector<2x4xf32>
      %cst_30 = arith.constant dense<0.000000e+00> : vector<2x64xf32>
      %28 = tpu.matmul %27, %20, %cst_30 {dimension_numbers = #tpu.dot_dimension_numbers<[1], [0], [0], [1], [0, 0, 1, 1], [], []>} : vector<2x4xf32>, vector<4x64xf32>, vector<2x64xf32> -> vector<2x64xf32>
      %29 = arith.negf %28 : vector<2x64xf32>
      %30 = math.exp %29 : vector<2x64xf32>
      %cst_31 = arith.constant 1.000000e+00 : f32
      %31 = vector.broadcast %cst_31 : f32 to vector<2x64xf32>
      %32 = arith.addf %31, %30 : vector<2x64xf32>
      %33 = arith.divf %31, %32 : vector<2x64xf32>
      %c0_32 = arith.constant 0 : index
      %c0_33 = arith.constant 0 : index
      %34 = vector.load %arg5[%c0_32, %c0_33] : memref<2x64xf32, #tpu.memory_space<vmem>>, vector<2x64xf32>
      tpu.vector_store %arg5[%c0_32, %c0_33], %33 {strides = array<i32>} : memref<2x64xf32, #tpu.memory_space<vmem>>, vector<2x64xf32>,
    } else {
    }
    return
  }
  func.func @transform_0(%arg0: i32, %arg1: i32) -> (i32, i32, i32) {
    %c0_i32 = arith.constant 0 : i32
    %c0_i32_0 = arith.constant 0 : i32
    return %arg0, %c0_i32, %arg1 : i32, i32, i32
  }
  func.func @transform_1(%arg0: i32, %arg1: i32) -> (i32, i32) {
    %c0_i32 = arith.constant 0 : i32
    %c0_i32_0 = arith.constant 0 : i32
    %c0_i32_1 = arith.constant 0 : i32
    return %c0_i32, %c0_i32_0 : i32, i32
  }
  func.func @transform_2(%arg0: i32, %arg1: i32) -> (i32, i32) {
    %c0_i32 = arith.constant 0 : i32
    %c0_i32_0 = arith.constant 0 : i32
    %c0_i32_1 = arith.constant 0 : i32
    return %c0_i32, %c0_i32_0 : i32, i32
  }
  func.func @transform_3(%arg0: i32, %arg1: i32) -> (i32, i32) {
    %c0_i32 = arith.constant 0 : i32
    %c0_i32_0 = arith.constant 0 : i32
    return %arg0, %c0_i32 : i32, i32
  }
}

</mosaic_0001>

<llo_original>
// kernel: tpu_custom_call.1
$region0: #{tpu_custom_call.1}
  #allocation0 [shape = 'u32[]', space=smem, size = 0x4, offset = 0x4, fixed_abs, tag = 'smem constant byte address 0x4 - core index']
  #allocation1 [shape = 'u32[144,128]{1,0:T(1,128)}', space=vmem, size = 0x12000, scoped, tag = 'internal scratch']
  #allocation2 [shape = 'f32[2,64,128]{2,1,0:T(8,128)}', space=vmem, size = 0x10000, scoped, tag = 'scratch operand']
  #allocation3 [shape = 'f32[2,64,128]{2,1,0:T(8,128)}', space=vmem, size = 0x10000, scoped, tag = 'scratch operand']
  %s0 = inlined_call_operand.hbm [shape: f32[2,64,256], index: 0, kind: input, shape index: {}]
  %s1 = inlined_call_operand.vmem [shape: f32[64,4], index: 1, kind: input, shape index: {}]
  %s2 = inlined_call_operand.vmem [shape: f32[4,64], index: 2, kind: input, shape index: {}]
  %s3 = inlined_call_operand.hbm [shape: f32[2,64], index: 3, kind: output, shape index: {}]
  %s4 = sld [smem:[#allocation0]]
  $region57: #{tpu_custom_call.1} parent=0
    _
  %s6 = ssub.s32 1, %s4
  %s7 = scalar_select 0, %s6, %s4
  $region1: #{tpu_custom_call.1} parent=0
    #allocation4 [shape = 'u8[131072]{0}', space=vmem, size = 0x20000, scoped, tag = 'input window, operand 0']
    #allocation5 [shape = 's32[2]{0}', space=sflag, size = 0x8, scoped, tag = 'scoped memory for tpu_custom_call.1']
    #allocation6 [shape = 's32[2]{0}', space=sflag, size = 0x8, scoped, tag = 'scoped memory for tpu_custom_call.1']
    #allocation7 [shape = 'u8[1024]{0}', space=vmem, size = 0x400, scoped, tag = 'output window, operand 0, single buffered']
    %8 = vsyncpa [#allocation5], 0
    %s9 = scalar_lea.sflag [#allocation5], 1
    %10 = vsyncpa %s9, 0
    %11 = vsyncpa [#allocation6], 0
    loop: start=0, step=1, limit=4
    $region2: #{tpu_custom_call.1} parent=1 // loop_pre_header
      _
    $region3: #{tpu_custom_call.1} parent=1 // loop_header
      %s13 = sphi 0, %s17
      %p14 = scmp.ge.s32.totalorder %s13, 4
      %s20 = sphi 0, %s32
      %s21 = sphi 0, %s28
      %s22 = sphi 0, %s20
      %s23 = sphi 0, %s21
      %s24 = sphi 0, %s22
      %s25 = sphi 0, %s23
      %s37 = sphi 0, %s39
      %s40 = sphi 0, %s37
      %s41 = sphi 0, %s40
      %s57 = sphi 0, %s41
      %s61 = sphi 0, %s61
      %s63 = sphi 0, %s61
      %s64 = sphi 0, %s63
      %s78 = sphi 0, %s64
      %s82 = sphi 0, %s82
      %s84 = sphi 0, %s82
      %s85 = sphi 0, %s84
      %s99 = sphi 0, %s85
      %s105 = sphi 0, %s107
      %s108 = sphi 0, %s105
      %s109 = sphi 0, %s108
      %s125 = sphi 0, %s109
    $region4: #{tpu_custom_call.1} parent=1 // loop_header_branch
      %16 = sbr.rel (%p14) target = $region8
    $region5: #{tpu_custom_call.1} parent=1 // loop_body
      %s18 = ssub.s32 %s13, 1
      %s19 = ssub.s32 %s13, 2
      %s26 = sadd.s32 1, %s21
      %p27 = scmp.ge.s32.totalorder %s26, 2
      %s28 = scalar_select %p27, 0, %s26
      %s29 = sadd.s32 1, %s20
      %s30 = scalar_select %p27, %s29, %s20
      %p31 = scmp.ge.s32.totalorder %s30, 1
      %s32 = scalar_select %p31, 0, %s30
      %s33 = ssub.s32 %s20, %s32
      %s34 = ssub.s32 %s21, %s28
      %s35 = sor.u32 %s33, %s34
      %p36 = scmp.eq.s32.totalorder %s35, 0
      %s38 = sadd.s32 %s37, 1
      %s39 = scalar_select %p36, %s37, %s38
      %p42 = pneg %p36
      %p43 = scmp.eq.s32.totalorder %s13, 1
      %p44 = por %p42, %p43
      %p45 = scmp.ne.s32.totalorder %s37, %s40
      %p46 = scmp.eq.s32.totalorder %s13, 0
      %p47 = por %p45, %p46
      %p48 = scmp.ne.s32.totalorder %s37, %s40
      %p49 = scmp.eq.s32.totalorder %s18, 1
      %p50 = por %p48, %p49
      %p51 = scmp.ne.s32.totalorder %s40, %s41
      %p52 = scmp.eq.s32.totalorder %s18, 0
      %p53 = por %p51, %p52
      %p54 = scmp.ne.s32.totalorder %s40, %s41
      %p55 = scmp.eq.s32.totalorder %s19, 1
      %p56 = por %p54, %p55
      %p58 = scmp.ne.s32.totalorder %s41, %s57
      %p59 = scmp.eq.s32.totalorder %s19, 0
      %p60 = por %p58, %p59
      %s62 = sadd.s32 %s61, 1
      %p65 = scmp.eq.s32.totalorder %s13, 1
      %p66 = scmp.ne.s32.totalorder %s61, %s63
      %p67 = scmp.eq.s32.totalorder %s13, 0
      %p68 = por %p66, %p67
      %p69 = scmp.ne.s32.totalorder %s61, %s63
      %p70 = scmp.eq.s32.totalorder %s18, 1
      %p71 = por %p69, %p70
      %p72 = scmp.ne.s32.totalorder %s63, %s64
      %p73 = scmp.eq.s32.totalorder %s18, 0
      %p74 = por %p72, %p73
      %p75 = scmp.ne.s32.totalorder %s63, %s64
      %p76 = scmp.eq.s32.totalorder %s19, 1
      %p77 = por %p75, %p76
      %p79 = scmp.ne.s32.totalorder %s64, %s78
      %p80 = scmp.eq.s32.totalorder %s19, 0
      %p81 = por %p79, %p80
      %s83 = sadd.s32 %s82, 1
      %p86 = scmp.eq.s32.totalorder %s13, 1
      %p87 = scmp.ne.s32.totalorder %s82, %s84
      %p88 = scmp.eq.s32.totalorder %s13, 0
      %p89 = por %p87, %p88
      %p90 = scmp.ne.s32.totalorder %s82, %s84
      %p91 = scmp.eq.s32.totalorder %s18, 1
      %p92 = por %p90, %p91
      %p93 = scmp.ne.s32.totalorder %s84, %s85
      %p94 = scmp.eq.s32.totalorder %s18, 0
      %p95 = por %p93, %p94
      %p96 = scmp.ne.s32.totalorder %s84, %s85
      %p97 = scmp.eq.s32.totalorder %s19, 1
      %p98 = por %p96, %p97
      %p100 = scmp.ne.s32.totalorder %s85, %s99
      %p101 = scmp.eq.s32.totalorder %s19, 0
      %p102 = por %p100, %p101
      %s103 = ssub.s32 %s20, %s32
      %p104 = scmp.eq.s32.totalorder %s103, 0
      %s106 = sadd.s32 %s105, 1
      %s107 = scalar_select %p104, %s105, %s106
      %p110 = pneg %p104
      %p111 = scmp.eq.s32.totalorder %s13, 1
      %p112 = por %p110, %p111
      %p113 = scmp.ne.s32.totalorder %s105, %s108
      %p114 = scmp.eq.s32.totalorder %s13, 0
      %p115 = por %p113, %p114
      %p116 = scmp.ne.s32.totalorder %s105, %s108
      %p117 = scmp.eq.s32.totalorder %s18, 1
      %p118 = por %p116, %p117
      %p119 = scmp.ne.s32.totalorder %s108, %s109
      %p120 = scmp.eq.s32.totalorder %s18, 0
      %p121 = por %p119, %p120
      %p122 = scmp.ne.s32.totalorder %s108, %s109
      %p123 = scmp.eq.s32.totalorder %s19, 1
      %p124 = por %p122, %p123
      %p126 = scmp.ne.s32.totalorder %s109, %s125
      %p127 = scmp.eq.s32.totalorder %s19, 0
      %p128 = por %p126, %p127
      %p129 = scmp.le.s32.totalorder 1, %s13
      %p130 = scmp.lt.s32.totalorder %s13, 3
      %p131 = pnand %p129, %p130
      %p132 = pneg %p131
      // Predicated region
      $region9: #{tpu_custom_call.1} parent=5 // pred_check
        _
      $region10: #{tpu_custom_call.1} parent=5 // pred_check_branch
        %134 = sbr.rel (%p131) target = $region12
      $region11: #{tpu_custom_call.1} parent=5 // pred_region
        %s135 = ssub.s32 %s13, 1
        // Predicated region
        $region13: #{tpu_custom_call.1} parent=11 // pred_check
          %p136 = pneg %p74
        $region14: #{tpu_custom_call.1} parent=11 // pred_check_branch
          %138 = sbr.rel (%p136) target = $region16
        $region15: #{tpu_custom_call.1} parent=11 // pred_region
          _
        $region16: #{tpu_custom_call.1} parent=11 // pred_fallthru
          _
        // Predicated region
        $region17: #{tpu_custom_call.1} parent=11 // pred_check
          %p139 = pneg %p95
        $region18: #{tpu_custom_call.1} parent=11 // pred_check_branch
          %141 = sbr.rel (%p139) target = $region20
        $region19: #{tpu_custom_call.1} parent=11 // pred_region
          _
        $region20: #{tpu_custom_call.1} parent=11 // pred_fallthru
          _
      $region12: #{tpu_custom_call.1} parent=5 // pred_fallthru
        _
      %p142 = scmp.lt.s32.totalorder %s13, 2
      // Predicated region
      $region21: #{tpu_custom_call.1} parent=5 // pred_check
        %p143 = pneg %p142
      $region22: #{tpu_custom_call.1} parent=5 // pred_check_branch
        %145 = sbr.rel (%p143) target = $region24
      $region23: #{tpu_custom_call.1} parent=5 // pred_region
        // Predicated region
        $region25: #{tpu_custom_call.1} parent=23 // pred_check
          %p146 = pneg %p47
        $region26: #{tpu_custom_call.1} parent=23 // pred_check_branch
          %148 = sbr.rel (%p146) target = $region28
        $region27: #{tpu_custom_call.1} parent=23 // pred_region
          %s149 = sand.u32 %s37, 1
          %s150 = scalar_lea.sflag [#allocation5], %s149
          %s151 = sand.u32 %s37, 1
          %s152 = smul.addr %s151, 128
          %s153 = scalar_lea.vmem [#allocation4], %s152
          %s154 = smul.u32 2, %s20
          %s156 = ssub.s32 2048, 2048
          %157 = vsyncadd %s150, %s156
          %s158 = smul.addr %s154, 16
          %s159 = sadd.s32 %s21, %s158
          %s160 = smul.addr %s159, 128
          %s161 = scalar_lea.hbm %s0, %s160
          %s162 = sshll.u32 %s153, 4
          %s163 = int_to_ptr.vmem [resolvable:$true] %s162
          %168 = dma.hbm_to_vmem [thread:$0]  %s161, 2048, %s163, %s150, 256, 128, 8
        $region28: #{tpu_custom_call.1} parent=23 // pred_fallthru
          _
      $region24: #{tpu_custom_call.1} parent=5 // pred_fallthru
        _
      %p169 = scmp.le.s32.totalorder 1, %s13
      %p170 = scmp.lt.s32.totalorder %s13, 3
      %p171 = pnand %p169, %p170
      %p172 = pneg %p171
      // Predicated region
      $region29: #{tpu_custom_call.1} parent=5 // pred_check
        _
      $region30: #{tpu_custom_call.1} parent=5 // pred_check_branch
        %174 = sbr.rel (%p171) target = $region32
      $region31: #{tpu_custom_call.1} parent=5 // pred_region
        %s175 = ssub.s32 %s13, 1
        %s176 = sand.u32 %s40, 1
        %s177 = scalar_lea.sflag [#allocation5], %s176
        %s178 = sand.u32 %s40, 1
        %s179 = smul.addr %s178, 128
        %s180 = scalar_lea.vmem [#allocation4], %s179
        // Predicated region
        $region33: #{tpu_custom_call.1} parent=31 // pred_check
          %p181 = pneg %p53
        $region34: #{tpu_custom_call.1} parent=31 // pred_check_branch
          %183 = sbr.rel (%p181) target = $region36
        $region35: #{tpu_custom_call.1} parent=31 // pred_region
          %184 = dma.done %s177, 2048
        $region36: #{tpu_custom_call.1} parent=31 // pred_fallthru
          _
        %s185 = sand.u32 %s40, 1
        %s186 = scalar_lea.sflag [#allocation5], %s185
        %s187 = sand.u32 %s40, 1
        %s188 = smul.addr %s187, 128
        %s189 = scalar_lea.vmem [#allocation4], %s188
        %p190 = pneg %p53
        %p191 = pneg %p50
        %p192 = pneg %p74
        %p193 = pneg %p71
        %p194 = pneg %p95
        %p195 = pneg %p92
        %p196 = pneg %p121
        %p197 = pneg %p118
        %s198 = smul.u32 2, %s22
        %p199 = scmp.eq.s32.totalorder %s23, 0
        // Predicated region
        $region37: #{tpu_custom_call.1} parent=31 // pred_check
          %p200 = pneg %p199
        $region38: #{tpu_custom_call.1} parent=31 // pred_check_branch
          %202 = sbr.rel (%p200) target = $region40
        $region39: #{tpu_custom_call.1} parent=31 // pred_region
          %203 = vst [vmem:[#allocation2] sm:$0xff] 0.0
          %204 = vst [vmem:[#allocation2 + $0x8] sm:$0xff] 0.0
          %205 = vst [vmem:[#allocation2 + $0x10] sm:$0xff] 0.0
          %206 = vst [vmem:[#allocation2 + $0x18] sm:$0xff] 0.0
          %207 = vst [vmem:[#allocation2 + $0x20] sm:$0xff] 0.0
          %208 = vst [vmem:[#allocation2 + $0x28] sm:$0xff] 0.0
          %209 = vst [vmem:[#allocation2 + $0x30] sm:$0xff] 0.0
          %210 = vst [vmem:[#allocation2 + $0x38] sm:$0xff] 0.0
          %211 = vst [vmem:[#allocation2 + $0x40] sm:$0xff] 0.0
          %212 = vst [vmem:[#allocation2 + $0x48] sm:$0xff] 0.0
          %213 = vst [vmem:[#allocation2 + $0x50] sm:$0xff] 0.0
          %214 = vst [vmem:[#allocation2 + $0x58] sm:$0xff] 0.0
          %215 = vst [vmem:[#allocation2 + $0x60] sm:$0xff] 0.0
          %216 = vst [vmem:[#allocation2 + $0x68] sm:$0xff] 0.0
          %217 = vst [vmem:[#allocation2 + $0x70] sm:$0xff] 0.0
          %218 = vst [vmem:[#allocation2 + $0x78] sm:$0xff] 0.0
          %219 = vst [vmem:[#allocation3] sm:$0xff] -inf
          %220 = vst [vmem:[#allocation3 + $0x8] sm:$0xff] -inf
          %221 = vst [vmem:[#allocation3 + $0x10] sm:$0xff] -inf
          %222 = vst [vmem:[#allocation3 + $0x18] sm:$0xff] -inf
          %223 = vst [vmem:[#allocation3 + $0x20] sm:$0xff] -inf
          %224 = vst [vmem:[#allocation3 + $0x28] sm:$0xff] -inf
          %225 = vst [vmem:[#allocation3 + $0x30] sm:$0xff] -inf
          %226 = vst [vmem:[#allocation3 + $0x38] sm:$0xff] -inf
          %227 = vst [vmem:[#allocation3 + $0x40] sm:$0xff] -inf
          %228 = vst [vmem:[#allocation3 + $0x48] sm:$0xff] -inf
          %229 = vst [vmem:[#allocation3 + $0x50] sm:$0xff] -inf
          %230 = vst [vmem:[#allocation3 + $0x58] sm:$0xff] -inf
          %231 = vst [vmem:[#allocation3 + $0x60] sm:$0xff] -inf
          %232 = vst [vmem:[#allocation3 + $0x68] sm:$0xff] -inf
          %233 = vst [vmem:[#allocation3 + $0x70] sm:$0xff] -inf
          %234 = vst [vmem:[#allocation3 + $0x78] sm:$0xff] -inf
        $region40: #{tpu_custom_call.1} parent=31 // pred_fallthru
          _
        %v235 = vld [vmem:[%s180] sm:$0xff]
        %v236 = vld [vmem:[%s180 + $0x8] sm:$0xff]
        %v237 = vld [vmem:[%s180 + $0x10] sm:$0xff]
        %v238 = vld [vmem:[%s180 + $0x18] sm:$0xff]
        %v239 = vld [vmem:[%s180 + $0x20] sm:$0xff]
        %v240 = vld [vmem:[%s180 + $0x28] sm:$0xff]
        %v241 = vld [vmem:[%s180 + $0x30] sm:$0xff]
        %v242 = vld [vmem:[%s180 + $0x38] sm:$0xff]
        %v243 = vld [vmem:[%s180 + $0x40] sm:$0xff]
        %v244 = vld [vmem:[%s180 + $0x48] sm:$0xff]
        %v245 = vld [vmem:[%s180 + $0x50] sm:$0xff]
        %v246 = vld [vmem:[%s180 + $0x58] sm:$0xff]
        %v247 = vld [vmem:[%s180 + $0x60] sm:$0xff]
        %v248 = vld [vmem:[%s180 + $0x68] sm:$0xff]
        %v249 = vld [vmem:[%s180 + $0x70] sm:$0xff]
        %v250 = vld [vmem:[%s180 + $0x78] sm:$0xff]
        %v251 = vld [vmem:[#allocation2] sm:$0xff]
        %v252 = vld [vmem:[#allocation2 + $0x8] sm:$0xff]
        %v253 = vld [vmem:[#allocation2 + $0x10] sm:$0xff]
        %v254 = vld [vmem:[#allocation2 + $0x18] sm:$0xff]
        %v255 = vld [vmem:[#allocation2 + $0x20] sm:$0xff]
        %v256 = vld [vmem:[#allocation2 + $0x28] sm:$0xff]
        %v257 = vld [vmem:[#allocation2 + $0x30] sm:$0xff]
        %v258 = vld [vmem:[#allocation2 + $0x38] sm:$0xff]
        %v259 = vld [vmem:[#allocation2 + $0x40] sm:$0xff]
        %v260 = vld [vmem:[#allocation2 + $0x48] sm:$0xff]
        %v261 = vld [vmem:[#allocation2 + $0x50] sm:$0xff]
        %v262 = vld [vmem:[#allocation2 + $0x58] sm:$0xff]
        %v263 = vld [vmem:[#allocation2 + $0x60] sm:$0xff]
        %v264 = vld [vmem:[#allocation2 + $0x68] sm:$0xff]
        %v265 = vld [vmem:[#allocation2 + $0x70] sm:$0xff]
        %v266 = vld [vmem:[#allocation2 + $0x78] sm:$0xff]
        %v267 = vadd.f32 %v251, %v235
        %v268 = vadd.f32 %v252, %v236
        %v269 = vadd.f32 %v253, %v237
        %v270 = vadd.f32 %v254, %v238
        %v271 = vadd.f32 %v255, %v239
        %v272 = vadd.f32 %v256, %v240
        %v273 = vadd.f32 %v257, %v241
        %v274 = vadd.f32 %v258, %v242
        %v275 = vadd.f32 %v259, %v243
        %v276 = vadd.f32 %v260, %v244
        %v277 = vadd.f32 %v261, %v245
        %v278 = vadd.f32 %v262, %v246
        %v279 = vadd.f32 %v263, %v247
        %v280 = vadd.f32 %v264, %v248
        %v281 = vadd.f32 %v265, %v249
        %v282 = vadd.f32 %v266, %v250
        %283 = vst [vmem:[#allocation2] sm:$0xff] %v267
        %284 = vst [vmem:[#allocation2 + $0x8] sm:$0xff] %v268
        %285 = vst [vmem:[#allocation2 + $0x10] sm:$0xff] %v269
        %286 = vst [vmem:[#allocation2 + $0x18] sm:$0xff] %v270
        %287 = vst [vmem:[#allocation2 + $0x20] sm:$0xff] %v271
        %288 = vst [vmem:[#allocation2 + $0x28] sm:$0xff] %v272
        %289 = vst [vmem:[#allocation2 + $0x30] sm:$0xff] %v273
        %290 = vst [vmem:[#allocation2 + $0x38] sm:$0xff] %v274
        %291 = vst [vmem:[#allocation2 + $0x40] sm:$0xff] %v275
        %292 = vst [vmem:[#allocation2 + $0x48] sm:$0xff] %v276
        %293 = vst [vmem:[#allocation2 + $0x50] sm:$0xff] %v277
        %294 = vst [vmem:[#allocation2 + $0x58] sm:$0xff] %v278
        %295 = vst [vmem:[#allocation2 + $0x60] sm:$0xff] %v279
        %296 = vst [vmem:[#allocation2 + $0x68] sm:$0xff] %v280
        %297 = vst [vmem:[#allocation2 + $0x70] sm:$0xff] %v281
        %298 = vst [vmem:[#allocation2 + $0x78] sm:$0xff] %v282
        %v299 = vld [vmem:[#allocation3] sm:$0xff]
        %v300 = vld [vmem:[#allocation3 + $0x8] sm:$0xff]
        %v301 = vld [vmem:[#allocation3 + $0x10] sm:$0xff]
        %v302 = vld [vmem:[#allocation3 + $0x18] sm:$0xff]
        %v303 = vld [vmem:[#allocation3 + $0x20] sm:$0xff]
        %v304 = vld [vmem:[#allocation3 + $0x28] sm:$0xff]
        %v305 = vld [vmem:[#allocation3 + $0x30] sm:$0xff]
        %v306 = vld [vmem:[#allocation3 + $0x38] sm:$0xff]
        %v307 = vld [vmem:[#allocation3 + $0x40] sm:$0xff]
        %v308 = vld [vmem:[#allocation3 + $0x48] sm:$0xff]
        %v309 = vld [vmem:[#allocation3 + $0x50] sm:$0xff]
        %v310 = vld [vmem:[#allocation3 + $0x58] sm:$0xff]
        %v311 = vld [vmem:[#allocation3 + $0x60] sm:$0xff]
        %v312 = vld [vmem:[#allocation3 + $0x68] sm:$0xff]
        %v313 = vld [vmem:[#allocation3 + $0x70] sm:$0xff]
        %v314 = vld [vmem:[#allocation3 + $0x78] sm:$0xff]
        %v315 = vmax.f32 %v299, %v235
        %v316 = vmax.f32 %v300, %v236
        %v317 = vmax.f32 %v301, %v237
        %v318 = vmax.f32 %v302, %v238
        %v319 = vmax.f32 %v303, %v239
        %v320 = vmax.f32 %v304, %v240
        %v321 = vmax.f32 %v305, %v241
        %v322 = vmax.f32 %v306, %v242
        %v323 = vmax.f32 %v307, %v243
        %v324 = vmax.f32 %v308, %v244
        %v325 = vmax.f32 %v309, %v245
        %v326 = vmax.f32 %v310, %v246
        %v327 = vmax.f32 %v311, %v247
        %v328 = vmax.f32 %v312, %v248
        %v329 = vmax.f32 %v313, %v249
        %v330 = vmax.f32 %v314, %v250
        %331 = vst [vmem:[#allocation3] sm:$0xff] %v315
        %332 = vst [vmem:[#allocation3 + $0x8] sm:$0xff] %v316
        %333 = vst [vmem:[#allocation3 + $0x10] sm:$0xff] %v317
        %334 = vst [vmem:[#allocation3 + $0x18] sm:$0xff] %v318
        %335 = vst [vmem:[#allocation3 + $0x20] sm:$0xff] %v319
        %336 = vst [vmem:[#allocation3 + $0x28] sm:$0xff] %v320
        %337 = vst [vmem:[#allocation3 + $0x30] sm:$0xff] %v321
        %338 = vst [vmem:[#allocation3 + $0x38] sm:$0xff] %v322
        %339 = vst [vmem:[#allocation3 + $0x40] sm:$0xff] %v323
        %340 = vst [vmem:[#allocation3 + $0x48] sm:$0xff] %v324
        %341 = vst [vmem:[#allocation3 + $0x50] sm:$0xff] %v325
        %342 = vst [vmem:[#allocation3 + $0x58] sm:$0xff] %v326
        %343 = vst [vmem:[#allocation3 + $0x60] sm:$0xff] %v327
        %344 = vst [vmem:[#allocation3 + $0x68] sm:$0xff] %v328
        %345 = vst [vmem:[#allocation3 + $0x70] sm:$0xff] %v329
        %346 = vst [vmem:[#allocation3 + $0x78] sm:$0xff] %v330
        %p347 = scmp.eq.s32.totalorder %s23, 1
        // Predicated region
        $region41: #{tpu_custom_call.1} parent=31 // pred_check
          %p348 = pneg %p347
        $region42: #{tpu_custom_call.1} parent=31 // pred_check_branch
          %350 = sbr.rel (%p348) target = $region44
        $region43: #{tpu_custom_call.1} parent=31 // pred_region
          %v351 = vld [vmem:[#allocation2] sm:$0xff]
          %v352 = vld [vmem:[#allocation2 + $0x8] sm:$0xff]
          %v353 = vld [vmem:[#allocation2 + $0x10] sm:$0xff]
          %v354 = vld [vmem:[#allocation2 + $0x18] sm:$0xff]
          %v355 = vld [vmem:[#allocation2 + $0x20] sm:$0xff]
          %v356 = vld [vmem:[#allocation2 + $0x28] sm:$0xff]
          %v357 = vld [vmem:[#allocation2 + $0x30] sm:$0xff]
          %v358 = vld [vmem:[#allocation2 + $0x38] sm:$0xff]
          %v359 = vld [vmem:[#allocation2 + $0x40] sm:$0xff]
          %v360 = vld [vmem:[#allocation2 + $0x48] sm:$0xff]
          %v361 = vld [vmem:[#allocation2 + $0x50] sm:$0xff]
          %v362 = vld [vmem:[#allocation2 + $0x58] sm:$0xff]
          %v363 = vld [vmem:[#allocation2 + $0x60] sm:$0xff]
          %v364 = vld [vmem:[#allocation2 + $0x68] sm:$0xff]
          %v365 = vld [vmem:[#allocation2 + $0x70] sm:$0xff]
          %v366 = vld [vmem:[#allocation2 + $0x78] sm:$0xff]
          %367 = vadd.xlane.f32.xlu0 %v351
          %v368 = vpop.xlane.xlu0 %367
          %369 = vadd.xlane.f32.xlu0 %v352
          %v370 = vpop.xlane.xlu0 %369
          %371 = vadd.xlane.f32.xlu0 %v353
          %v372 = vpop.xlane.xlu0 %371
          %373 = vadd.xlane.f32.xlu0 %v354
          %v374 = vpop.xlane.xlu0 %373
          %375 = vadd.xlane.f32.xlu0 %v355
          %v376 = vpop.xlane.xlu0 %375
          %377 = vadd.xlane.f32.xlu0 %v356
          %v378 = vpop.xlane.xlu0 %377
          %379 = vadd.xlane.f32.xlu0 %v357
          %v380 = vpop.xlane.xlu0 %379
          %381 = vadd.xlane.f32.xlu0 %v358
          %v382 = vpop.xlane.xlu0 %381
          %383 = vadd.xlane.f32.xlu0 %v359
          %v384 = vpop.xlane.xlu0 %383
          %385 = vadd.xlane.f32.xlu0 %v360
          %v386 = vpop.xlane.xlu0 %385
          %387 = vadd.xlane.f32.xlu0 %v361
          %v388 = vpop.xlane.xlu0 %387
          %389 = vadd.xlane.f32.xlu0 %v362
          %v390 = vpop.xlane.xlu0 %389
          %391 = vadd.xlane.f32.xlu0 %v363
          %v392 = vpop.xlane.xlu0 %391
          %393 = vadd.xlane.f32.xlu0 %v364
          %v394 = vpop.xlane.xlu0 %393
          %395 = vadd.xlane.f32.xlu0 %v365
          %v396 = vpop.xlane.xlu0 %395
          %397 = vadd.xlane.f32.xlu0 %v366
          %v398 = vpop.xlane.xlu0 %397
          %v399 = vmul.f32 %v368, 0.00390625
          %v400 = vmul.f32 %v370, 0.00390625
          %v401 = vmul.f32 %v372, 0.00390625
          %v402 = vmul.f32 %v374, 0.00390625
          %v403 = vmul.f32 %v376, 0.00390625
          %v404 = vmul.f32 %v378, 0.00390625
          %v405 = vmul.f32 %v380, 0.00390625
          %v406 = vmul.f32 %v382, 0.00390625
          %v407 = vmul.f32 %v384, 0.00390625
          %v408 = vmul.f32 %v386, 0.00390625
          %v409 = vmul.f32 %v388, 0.00390625
          %v410 = vmul.f32 %v390, 0.00390625
          %v411 = vmul.f32 %v392, 0.00390625
          %v412 = vmul.f32 %v394, 0.00390625
          %v413 = vmul.f32 %v396, 0.00390625
          %v414 = vmul.f32 %v398, 0.00390625
          %v415 = vld [vmem:[#allocation3] sm:$0xff]
          %v416 = vld [vmem:[#allocation3 + $0x8] sm:$0xff]
          %v417 = vld [vmem:[#allocation3 + $0x10] sm:$0xff]
          %v418 = vld [vmem:[#allocation3 + $0x18] sm:$0xff]
          %v419 = vld [vmem:[#allocation3 + $0x20] sm:$0xff]
          %v420 = vld [vmem:[#allocation3 + $0x28] sm:$0xff]
          %v421 = vld [vmem:[#allocation3 + $0x30] sm:$0xff]
          %v422 = vld [vmem:[#allocation3 + $0x38] sm:$0xff]
          %v423 = vld [vmem:[#allocation3 + $0x40] sm:$0xff]
          %v424 = vld [vmem:[#allocation3 + $0x48] sm:$0xff]
          %v425 = vld [vmem:[#allocation3 + $0x50] sm:$0xff]
          %v426 = vld [vmem:[#allocation3 + $0x58] sm:$0xff]
          %v427 = vld [vmem:[#allocation3 + $0x60] sm:$0xff]
          %v428 = vld [vmem:[#allocation3 + $0x68] sm:$0xff]
          %v429 = vld [vmem:[#allocation3 + $0x70] sm:$0xff]
          %v430 = vld [vmem:[#allocation3 + $0x78] sm:$0xff]
          %431 = vmax.xlane.f32.xlu0 %v415
          %v432 = vpop.xlane.xlu0 %431
          %433 = vmax.xlane.f32.xlu0 %v416
          %v434 = vpop.xlane.xlu0 %433
          %435 = vmax.xlane.f32.xlu0 %v417
          %v436 = vpop.xlane.xlu0 %435
          %437 = vmax.xlane.f32.xlu0 %v418
          %v438 = vpop.xlane.xlu0 %437
          %439 = vmax.xlane.f32.xlu0 %v419
          %v440 = vpop.xlane.xlu0 %439
          %441 = vmax.xlane.f32.xlu0 %v420
          %v442 = vpop.xlane.xlu0 %441
          %443 = vmax.xlane.f32.xlu0 %v421
          %v444 = vpop.xlane.xlu0 %443
          %445 = vmax.xlane.f32.xlu0 %v422
          %v446 = vpop.xlane.xlu0 %445
          %447 = vmax.xlane.f32.xlu0 %v423
          %v448 = vpop.xlane.xlu0 %447
          %449 = vmax.xlane.f32.xlu0 %v424
          %v450 = vpop.xlane.xlu0 %449
          %451 = vmax.xlane.f32.xlu0 %v425
          %v452 = vpop.xlane.xlu0 %451
          %453 = vmax.xlane.f32.xlu0 %v426
          %v454 = vpop.xlane.xlu0 %453
          %455 = vmax.xlane.f32.xlu0 %v427
          %v456 = vpop.xlane.xlu0 %455
          %457 = vmax.xlane.f32.xlu0 %v428
          %v458 = vpop.xlane.xlu0 %457
          %459 = vmax.xlane.f32.xlu0 %v429
          %v460 = vpop.xlane.xlu0 %459
          %461 = vmax.xlane.f32.xlu0 %v430
          %v462 = vpop.xlane.xlu0 %461
          %v463 = vld [vmem:[%s1] sm:$0xff]
          %v464 = vld [vmem:[%s1 + $0x8] sm:$0xff]
          %v465 = vld [vmem:[%s1 + $0x10] sm:$0xff]
          %v466 = vld [vmem:[%s1 + $0x18] sm:$0xff]
          %v467 = vld [vmem:[%s1 + $0x20] sm:$0xff]
          %v468 = vld [vmem:[%s1 + $0x28] sm:$0xff]
          %v469 = vld [vmem:[%s1 + $0x30] sm:$0xff]
          %v470 = vld [vmem:[%s1 + $0x38] sm:$0xff]
          %v471 = vld [vmem:[%s2] sm:$0xf]
          %v488 = vlaneseq
          %v489 = vand.u32 %v488, 127
          %v490 = vlaneseq
          %v491 = vshrl.u32 %v490, 7
          %v492 = vsub.s32 %v489, %v491
          %v493 = vrot.slane %v399, %v492
          %v494 = vadd.s32 %v489, 4294967288
          %v495 = vlaneseq
          %v496 = vshrl.u32 %v495, 7
          %v497 = vsub.s32 %v494, %v496
          %v498 = vrot.slane %v400, %v497
          %vm499 = vcmask 130112
          %v500 = vsel %vm499, %v498, %v493
          %v501 = vadd.s32 %v489, 4294967280
          %v502 = vlaneseq
          %v503 = vshrl.u32 %v502, 7
          %v504 = vsub.s32 %v501, %v503
          %v505 = vrot.slane %v401, %v504
          %vm506 = vcmask 195712
          %v507 = vsel %vm506, %v505, %v500
          %v508 = vadd.s32 %v489, 4294967272
          %v509 = vlaneseq
          %v510 = vshrl.u32 %v509, 7
          %v511 = vsub.s32 %v508, %v510
          %v512 = vrot.slane %v402, %v511
          %vm513 = vcmask 261312
          %v514 = vsel %vm513, %v512, %v507
          %v515 = vadd.s32 %v489, 4294967264
          %v516 = vlaneseq
          %v517 = vshrl.u32 %v516, 7
          %v518 = vsub.s32 %v515, %v517
          %v519 = vrot.slane %v403, %v518
          %vm520 = vcmask 326912
          %v521 = vsel %vm520, %v519, %v514
          %v522 = vadd.s32 %v489, 4294967256
          %v523 = vlaneseq
          %v524 = vshrl.u32 %v523, 7
          %v525 = vsub.s32 %v522, %v524
          %v526 = vrot.slane %v404, %v525
          %vm527 = vcmask 392512
          %v528 = vsel %vm527, %v526, %v521
          %v529 = vadd.s32 %v489, 4294967248
          %v530 = vlaneseq
          %v531 = vshrl.u32 %v530, 7
          %v532 = vsub.s32 %v529, %v531
          %v533 = vrot.slane %v405, %v532
          %vm534 = vcmask 458112
          %v535 = vsel %vm534, %v533, %v528
          %v536 = vadd.s32 %v489, 4294967240
          %v537 = vlaneseq
          %v538 = vshrl.u32 %v537, 7
          %v539 = vsub.s32 %v536, %v538
          %v540 = vrot.slane %v406, %v539
          %vm541 = vcmask 523712
          %v542 = vsel %vm541, %v540, %v535
          %v543 = vlaneseq
          %v544 = vshrl.u32 %v543, 7
          %v545 = vsub.s32 %v489, %v544
          %v546 = vrot.slane %v407, %v545
          %v547 = vlaneseq
          %v548 = vshrl.u32 %v547, 7
          %v549 = vsub.s32 %v494, %v548
          %v550 = vrot.slane %v408, %v549
          %v551 = vsel %vm499, %v550, %v546
          %v552 = vlaneseq
          %v553 = vshrl.u32 %v552, 7
          %v554 = vsub.s32 %v501, %v553
          %v555 = vrot.slane %v409, %v554
          %v556 = vsel %vm506, %v555, %v551
          %v557 = vlaneseq
          %v558 = vshrl.u32 %v557, 7
          %v559 = vsub.s32 %v508, %v558
          %v560 = vrot.slane %v410, %v559
          %v561 = vsel %vm513, %v560, %v556
          %v562 = vlaneseq
          %v563 = vshrl.u32 %v562, 7
          %v564 = vsub.s32 %v515, %v563
          %v565 = vrot.slane %v411, %v564
          %v566 = vsel %vm520, %v565, %v561
          %v567 = vlaneseq
          %v568 = vshrl.u32 %v567, 7
          %v569 = vsub.s32 %v522, %v568
          %v570 = vrot.slane %v412, %v569
          %v571 = vsel %vm527, %v570, %v566
          %v572 = vlaneseq
          %v573 = vshrl.u32 %v572, 7
          %v574 = vsub.s32 %v529, %v573
          %v575 = vrot.slane %v413, %v574
          %v576 = vsel %vm534, %v575, %v571
          %v577 = vlaneseq
          %v578 = vshrl.u32 %v577, 7
          %v579 = vsub.s32 %v536, %v578
          %v580 = vrot.slane %v414, %v579
          %v581 = vsel %vm541, %v580, %v576
          %vm582 = vcmask 1041409
          %v583 = vsel %vm582, %v581, %v542
          %v601 = vlaneseq
          %v602 = vshrl.u32 %v601, 7
          %v603 = vsub.s32 %v489, %v602
          %v604 = vrot.slane %v432, %v603
          %v605 = vlaneseq
          %v606 = vshrl.u32 %v605, 7
          %v607 = vsub.s32 %v494, %v606
          %v608 = vrot.slane %v434, %v607
          %v609 = vsel %vm499, %v608, %v604
          %v610 = vlaneseq
          %v611 = vshrl.u32 %v610, 7
          %v612 = vsub.s32 %v501, %v611
          %v613 = vrot.slane %v436, %v612
          %v614 = vsel %vm506, %v613, %v609
          %v615 = vlaneseq
          %v616 = vshrl.u32 %v615, 7
          %v617 = vsub.s32 %v508, %v616
          %v618 = vrot.slane %v438, %v617
          %v619 = vsel %vm513, %v618, %v614
          %v620 = vlaneseq
          %v621 = vshrl.u32 %v620, 7
          %v622 = vsub.s32 %v515, %v621
          %v623 = vrot.slane %v440, %v622
          %v624 = vsel %vm520, %v623, %v619
          %v625 = vlaneseq
          %v626 = vshrl.u32 %v625, 7
          %v627 = vsub.s32 %v522, %v626
          %v628 = vrot.slane %v442, %v627
          %v629 = vsel %vm527, %v628, %v624
          %v630 = vlaneseq
          %v631 = vshrl.u32 %v630, 7
          %v632 = vsub.s32 %v529, %v631
          %v633 = vrot.slane %v444, %v632
          %v634 = vsel %vm534, %v633, %v629
          %v635 = vlaneseq
          %v636 = vshrl.u32 %v635, 7
          %v637 = vsub.s32 %v536, %v636
          %v638 = vrot.slane %v446, %v637
          %v639 = vsel %vm541, %v638, %v634
          %v640 = vlaneseq
          %v641 = vshrl.u32 %v640, 7
          %v642 = vsub.s32 %v489, %v641
          %v643 = vrot.slane %v448, %v642
          %v644 = vlaneseq
          %v645 = vshrl.u32 %v644, 7
          %v646 = vsub.s32 %v494, %v645
          %v647 = vrot.slane %v450, %v646
          %v648 = vsel %vm499, %v647, %v643
          %v649 = vlaneseq
          %v650 = vshrl.u32 %v649, 7
          %v651 = vsub.s32 %v501, %v650
          %v652 = vrot.slane %v452, %v651
          %v653 = vsel %vm506, %v652, %v648
          %v654 = vlaneseq
          %v655 = vshrl.u32 %v654, 7
          %v656 = vsub.s32 %v508, %v655
          %v657 = vrot.slane %v454, %v656
          %v658 = vsel %vm513, %v657, %v653
          %v659 = vlaneseq
          %v660 = vshrl.u32 %v659, 7
          %v661 = vsub.s32 %v515, %v660
          %v662 = vrot.slane %v456, %v661
          %v663 = vsel %vm520, %v662, %v658
          %v664 = vlaneseq
          %v665 = vshrl.u32 %v664, 7
          %v666 = vsub.s32 %v522, %v665
          %v667 = vrot.slane %v458, %v666
          %v668 = vsel %vm527, %v667, %v663
          %v669 = vlaneseq
          %v670 = vshrl.u32 %v669, 7
          %v671 = vsub.s32 %v529, %v670
          %v672 = vrot.slane %v460, %v671
          %v673 = vsel %vm534, %v672, %v668
          %v674 = vlaneseq
          %v675 = vshrl.u32 %v674, 7
          %v676 = vsub.s32 %v536, %v675
          %v677 = vrot.slane %v462, %v676
          %v678 = vsel %vm541, %v677, %v673
          %vm679 = vcmask 1043459
          %v680 = vsel %vm679, %v678, %v639
          %vm682 = vcmask 1041408
          %v683 = vsel %vm682, %v583, %v680
          %vm684 = vcmask 523264
          %v686 = vsel %vm684, %v683, 0
          %688 = vmatprep.subr.mxu0 0.0
          %689 = vmatpush1.msra.mxu0 0.0
          %690 = vmatprep.subr.mxu0 0.0
          %691 = vmatpush1.msra.mxu0 0.0
          %692 = vmatprep.subr.mxu0 0.0
          %693 = vmatpush1.msra.mxu0 0.0
          %694 = vmatprep.subr.mxu0 0.0
          %695 = vmatpush1.msra.mxu0 0.0
          %696 = vmatprep.subr.mxu0 0.0
          %697 = vmatpush1.msra.mxu0 0.0
          %698 = vmatprep.subr.mxu0 0.0
          %699 = vmatpush1.msra.mxu0 0.0
          %700 = vmatprep.subr.mxu0 0.0
          %701 = vmatpush1.msra.mxu0 0.0
          %702 = vmatprep.subr.mxu0 0.0
          %703 = vmatpush1.msra.mxu0 0.0
          %704 = vmatprep.subr.mxu0 0.0
          %705 = vmatpush1.msra.mxu0 %v470
          %706 = vmatprep.subr.mxu0 0.0
          %707 = vmatpush1.msra.mxu0 %v469
          %708 = vmatprep.subr.mxu0 0.0
          %709 = vmatpush1.msra.mxu0 %v468
          %710 = vmatprep.subr.mxu0 0.0
          %711 = vmatpush1.msra.mxu0 %v467
          %712 = vmatprep.subr.mxu0 0.0
          %713 = vmatpush1.msra.mxu0 %v466
          %714 = vmatprep.subr.mxu0 0.0
          %715 = vmatpush1.msra.mxu0 %v465
          %716 = vmatprep.subr.mxu0 0.0
          %717 = vmatpush1.msra.mxu0 %v464
          %718 = vmatprep.subr.mxu0 0.0
          %719 = vmatpush1.msra.mxu0 %v463
          %720 = vmatprep.subr.mxu0 0.0
          %721 = vmatpush2.msra.mxu0 0.0
          %722 = vmatprep.subr.mxu0 0.0
          %723 = vmatpush2.msra.mxu0 0.0
          %724 = vmatprep.subr.mxu0 0.0
          %725 = vmatpush2.msra.mxu0 0.0
          %726 = vmatprep.subr.mxu0 0.0
          %727 = vmatpush2.msra.mxu0 0.0
          %728 = vmatprep.subr.mxu0 0.0
          %729 = vmatpush2.msra.mxu0 0.0
          %730 = vmatprep.subr.mxu0 0.0
          %731 = vmatpush2.msra.mxu0 0.0
          %732 = vmatprep.subr.mxu0 0.0
          %733 = vmatpush2.msra.mxu0 0.0
          %734 = vmatprep.subr.mxu0 0.0
          %735 = vmatpush2.msra.mxu0 0.0
          %736 = vmatprep.subr.mxu0 0.0
          %737 = vmatpush2.msra.mxu0 0.0
          %738 = vmatprep.subr.mxu0 0.0
          %739 = vmatpush2.msra.mxu0 0.0
          %740 = vmatprep.subr.mxu0 0.0
          %741 = vmatpush2.msra.mxu0 0.0
          %742 = vmatprep.subr.mxu0 0.0
          %743 = vmatpush2.msra.mxu0 0.0
          %744 = vmatprep.subr.mxu0 0.0
          %745 = vmatpush2.msra.mxu0 0.0
          %746 = vmatprep.subr.mxu0 0.0
          %747 = vmatpush2.msra.mxu0 0.0
          %748 = vmatprep.subr.mxu0 0.0
          %749 = vmatpush2.msra.mxu0 0.0
          %750 = vmatprep.subr.mxu0 0.0
          %751 = vmatpush2.msra.mxu0 0.0
          %752 = vmatprep.mubr.f32.mxu0 0.0
          %753 = vmatmul.mubr.f32.gmra.mxu0 %v686
          %v754 = vpop.f32.mrf.mxu0
          %v755 = vadd.f32 0.0, %v754
          %v756 = vpop.f32.mrf.mxu0
          %757 = vdwg.mxu0
          %v758 = vmax.f32 %v755, 0.0
          %v760 = vrot.slane %v758, 2
          %v762 = vadd.f32 %v758, %v760
          %vm763 = vcmask 31744
          %v765 = vsel %vm763, %v762, 0
          %vm767 = vcmask 1043456
          %v769 = vsel %vm767, %v471, 0
          %771 = vmatprep.subr.mxu0 0.0
          %772 = vmatpush1.msra.mxu0 0.0
          %773 = vmatprep.subr.mxu0 0.0
          %774 = vmatpush1.msra.mxu0 0.0
          %775 = vmatprep.subr.mxu0 0.0
          %776 = vmatpush1.msra.mxu0 0.0
          %777 = vmatprep.subr.mxu0 0.0
          %778 = vmatpush1.msra.mxu0 0.0
          %779 = vmatprep.subr.mxu0 0.0
          %780 = vmatpush1.msra.mxu0 0.0
          %781 = vmatprep.subr.mxu0 0.0
          %782 = vmatpush1.msra.mxu0 0.0
          %783 = vmatprep.subr.mxu0 0.0
          %784 = vmatpush1.msra.mxu0 0.0
          %785 = vmatprep.subr.mxu0 0.0
          %786 = vmatpush1.msra.mxu0 0.0
          %787 = vmatprep.subr.mxu0 0.0
          %788 = vmatpush1.msra.mxu0 0.0
          %789 = vmatprep.subr.mxu0 0.0
          %790 = vmatpush1.msra.mxu0 0.0
          %791 = vmatprep.subr.mxu0 0.0
          %792 = vmatpush1.msra.mxu0 0.0
          %793 = vmatprep.subr.mxu0 0.0
          %794 = vmatpush1.msra.mxu0 0.0
          %795 = vmatprep.subr.mxu0 0.0
          %796 = vmatpush1.msra.mxu0 0.0
          %797 = vmatprep.subr.mxu0 0.0
          %798 = vmatpush1.msra.mxu0 0.0
          %799 = vmatprep.subr.mxu0 0.0
          %800 = vmatpush1.msra.mxu0 0.0
          %801 = vmatprep.subr.mxu0 0.0
          %802 = vmatpush1.msra.mxu0 %v769
          %803 = vmatprep.subr.mxu0 0.0
          %804 = vmatpush2.msra.mxu0 0.0
          %805 = vmatprep.subr.mxu0 0.0
          %806 = vmatpush2.msra.mxu0 0.0
          %807 = vmatprep.subr.mxu0 0.0
          %808 = vmatpush2.msra.mxu0 0.0
          %809 = vmatprep.subr.mxu0 0.0
          %810 = vmatpush2.msra.mxu0 0.0
          %811 = vmatprep.subr.mxu0 0.0
          %812 = vmatpush2.msra.mxu0 0.0
          %813 = vmatprep.subr.mxu0 0.0
          %814 = vmatpush2.msra.mxu0 0.0
          %815 = vmatprep.subr.mxu0 0.0
          %816 = vmatpush2.msra.mxu0 0.0
          %817 = vmatprep.subr.mxu0 0.0
          %818 = vmatpush2.msra.mxu0 0.0
          %819 = vmatprep.subr.mxu0 0.0
          %820 = vmatpush2.msra.mxu0 0.0
          %821 = vmatprep.subr.mxu0 0.0
          %822 = vmatpush2.msra.mxu0 0.0
          %823 = vmatprep.subr.mxu0 0.0
          %824 = vmatpush2.msra.mxu0 0.0
          %825 = vmatprep.subr.mxu0 0.0
          %826 = vmatpush2.msra.mxu0 0.0
          %827 = vmatprep.subr.mxu0 0.0
          %828 = vmatpush2.msra.mxu0 0.0
          %829 = vmatprep.subr.mxu0 0.0
          %830 = vmatpush2.msra.mxu0 0.0
          %831 = vmatprep.subr.mxu0 0.0
          %832 = vmatpush2.msra.mxu0 0.0
          %833 = vmatprep.subr.mxu0 0.0
          %834 = vmatpush2.msra.mxu0 0.0
          %835 = vmatprep.mubr.f32.mxu0 0.0
          %836 = vmatmul.mubr.f32.gmra.mxu0 %v765
          %v837 = vpop.f32.mrf.mxu0
          %v838 = vadd.f32 0.0, %v837
          %v839 = vpop.f32.mrf.mxu0
          %840 = vdwg.mxu0
          %v841 = vxor.u32 %v838, 2147483648
          %v842 = vmul.f32 %v841, 1.442695
          %v843 = vpow.pop %v842
          %v844 = vadd.f32 %v843, 1.0
          %v845 = vrcp.pop %v844
          %v846 = vmul.f32 1.0, %v845
          %vm847 = vcmask 517120
          %848 = vst.msk [vmem:[#allocation7] sm:$0x3] %vm847, %v846
        $region44: #{tpu_custom_call.1} parent=31 // pred_fallthru
          _
        // Predicated region
        $region45: #{tpu_custom_call.1} parent=31 // pred_check
          %p849 = pneg %p118
        $region46: #{tpu_custom_call.1} parent=31 // pred_check_branch
          %851 = sbr.rel (%p849) target = $region48
        $region47: #{tpu_custom_call.1} parent=31 // pred_region
          %s853 = ssub.s32 32, 32
          %854 = vsyncadd [#allocation6], %s853
          %s855 = smul.addr %s22, 32
          %s856 = scalar_lea.hbm %s3, %s855
          %s858 = sshll.u32 [#allocation7], 4
          %s859 = int_to_ptr.vmem [resolvable:$true] %s858
          %861 = dma.vmem_to_hbm [thread:$0]  %s859, 32, %s856, [#allocation6]
        $region48: #{tpu_custom_call.1} parent=31 // pred_fallthru
          _
        // Predicated region
        $region49: #{tpu_custom_call.1} parent=31 // pred_check
          %p862 = pneg %p118
        $region50: #{tpu_custom_call.1} parent=31 // pred_check_branch
          %864 = sbr.rel (%p862) target = $region52
        $region51: #{tpu_custom_call.1} parent=31 // pred_region
          %865 = dma.done [#allocation6], 32
        $region52: #{tpu_custom_call.1} parent=31 // pred_fallthru
          _
      $region32: #{tpu_custom_call.1} parent=5 // pred_fallthru
        _
      %p866 = scmp.le.s32.totalorder 2, %s13
      // Predicated region
      $region53: #{tpu_custom_call.1} parent=5 // pred_check
        %p867 = pneg %p866
      $region54: #{tpu_custom_call.1} parent=5 // pred_check_branch
        %869 = sbr.rel (%p867) target = $region56
      $region55: #{tpu_custom_call.1} parent=5 // pred_region
        %s870 = ssub.s32 %s13, 2
      $region56: #{tpu_custom_call.1} parent=5 // pred_fallthru
        _
    $region6: #{tpu_custom_call.1} parent=1 // loop_footer
      %s17 = sadd.s32 1, %s13
    $region7: #{tpu_custom_call.1} parent=1 // loop_footer_branch
      %12 = sbr.rel target = $region3
    $region8: #{tpu_custom_call.1} parent=1 // loop_exit
      _
    %871 = vsyncpa [#allocation5], 1
    %s872 = scalar_lea.sflag [#allocation5], 1
    %873 = vsyncpa %s872, 1
    %874 = vsyncpa [#allocation6], 1
    %s875 = scalar_lea.sflag [#allocation6], 1
    %876 = vsyncpa %s875, 1

</llo_original>
